<compile_context>
chip_gen: v5e
topology: v5e:2x2
jax: 0.10.0
libtpu: 0.0.40
codegen_flags: <defaults>
</compile_context>

<pallas_src>
import jax
import jax.numpy as jnp
from jax import lax
from jax.experimental import pallas as pl
from jax.experimental.pallas import tpu as pltpu

EPS = 1e-5  # PyTorch InstanceNorm2d default (affine=False, biased variance)

# ConvTranspose2d(k=4, s=2, p=1): out[oh] += x[ih] * W[kh] with oh = 2*ih + kh - 1.
# For output row parity ph (oh = 2r + ph) the contributing (kernel row kh, input row r+dh):
_TAPS_H = (((1, 0), (3, -1)),   # ph = 0
           ((2, 0), (0, +1)))   # ph = 1
_TAPS_W = (((1, 0), (3, -1)),   # pw = 0
           ((2, 0), (0, +1)))   # pw = 1


def _phase_taps():
    """Per output phase p = ph*2 + pw: list of 4 ((kh, kw), (dh, dw)) taps."""
    phases = []
    for ph in range(2):
        for pw in range(2):
            taps = []
            for kh, dh in _TAPS_H[ph]:
                for kw, dw in _TAPS_W[pw]:
                    taps.append(((kh, kw), (dh, dw)))
            phases.append(taps)
    return phases


def _bitcast_low_half_is_element0() -> bool:
    """Probe lax.bitcast_convert_type(u32 -> bf16) element order once (concrete, at import),
    so the in-kernel packing order can never disagree with the wrapper-side unpack."""
    probe = jax.lax.bitcast_convert_type(
        jnp.array([0x3F800000], jnp.uint32), jnp.bfloat16)   # low half 0x0000, high 0x3F80
    return bool(probe[0, 0] == 0.0)


_LOW_IS_ELEMENT0 = _bitcast_low_half_is_element0()


def _make_kernel(nb, tc, H, W, low_is_first):
    HW = H * W
    phases = _phase_taps()
    inv_count = 1.0 / float(4 * HW)

    def kernel(x_ref, w_ref, o_ref, y_scr):
        # x_ref: (nb, Cin_p, HW)            w_ref: (4, 4*tc, Cin_p)
        # o_ref: (nb, 2, tc, HW) uint32     (each u32 = packed bf16 pair: ow=2c, ow=2c+1)
        # y_scr: VMEM (4, tc, HW) f32       un-normalized phase slabs (two-pass InstanceNorm)
        idx = lax.broadcasted_iota(jnp.int32, (1, HW), 1)          # flat spatial index
        if W & (W - 1) == 0:
            col = jnp.bitwise_and(idx, W - 1)
        else:
            col = lax.rem(idx, W)

        # Hoisted boundary masks, one per (dh, dw) shift; also cover all roll wrap lanes.
        row_ok = {-1: idx >= W, 0: None, 1: idx < HW - W}
        col_ok = {-1: col >= 1, 0: None, 1: col <= W - 2}
        masks = {}
        for dh in (-1, 0, 1):
            for dw in (-1, 0, 1):
                m = None
                for c in (row_ok[dh], col_ok[dw]):
                    if c is not None:
                        m = c if m is None else jnp.logical_and(m, c)
                masks[(dh, dw)] = m

        def bf16_bits(v):
            # f32 -> bf16 bit pattern (round to nearest even), returned in the low 16 bits.
            b = pltpu.bitcast(v, jnp.uint32)
            b = b + jnp.uint32(0x7FFF) + ((b >> 16) & jnp.uint32(1))
            return b >> 16

        for s in range(nb):
            x_s = x_ref[s]                                          # (Cin_p, HW)

            # ---- pass 1: per-phase conv taps -> scratch, accumulate per-channel sum ----
            s1 = jnp.zeros((tc, 1), jnp.float32)
            for p in range(4):
                # The 4 taps of this phase as one lane-dense MXU matmul (f32 accumulation).
                z = jnp.dot(w_ref[p], x_s, preferred_element_type=jnp.float32)  # (4*tc, HW)
                acc = None
                for j, (_, (dh, dw)) in enumerate(phases[p]):
                    zt = z[j * tc:(j + 1) * tc, :]
                    k = dh * W + dw                                 # pull from flat idx + k
                    if k != 0:
                        zt = pltpu.roll(zt, shift=(-k) % HW, axis=1)   # XLU, not VPU copies
                    m = masks[(dh, dw)]
                    if m is not None:
                        zt = jnp.where(m, zt, 0.0)
                    acc = zt if acc is None else acc + zt
                y_scr[p] = acc
                s1 = s1 + jnp.sum(acc, axis=1, keepdims=True)

            mean = s1 * inv_count

            # ---- pass 2: mean-subtracted (biased) variance -----------------------------
            s2 = jnp.zeros((tc, 1), jnp.float32)
            for p in range(4):
                d = y_scr[p] - mean
                s2 = s2 + jnp.sum(d * d, axis=1, keepdims=True)
            scale = lax.rsqrt(s2 * inv_count + EPS)

            # ---- pass 3: normalize + ReLU + pack the two pw phases into u32 lanes ------
            for ph in range(2):
                y_even = jnp.maximum((y_scr[ph * 2 + 0] - mean) * scale, 0.0)   # ow = 2c
                y_odd = jnp.maximum((y_scr[ph * 2 + 1] - mean) * scale, 0.0)    # ow = 2c+1
                lo, hi = (y_even, y_odd) if low_is_first else (y_odd, y_even)
                o_ref[s, ph] = bf16_bits(lo) | (bf16_bits(hi) << 16)

    return kernel


def _largest_divisor_le(n, cap):
    cap = max(1, min(n, cap))
    for d in range(cap, 0, -1):
        if n % d == 0:
            return d
    return 1


def _pick_cout_tile(cout):
    if cout <= 128:
        return cout
    best = 0
    for d in range(8, 129, 8):
        if cout % d == 0:
            best = d
    return best if best else cout


def unet_up_nobp(x, skip, weight, *, mxu_dtype=jnp.bfloat16, out_dtype=jnp.bfloat16):
    """UNetUpNOBP.forward.
    x: (N, Cin, H, W); skip: (N, Cs, 2H, 2W);
    weight: (Cin, Cout, 4, 4) as in nn.ConvTranspose2d(in, out, 4, 2, 1, bias=False).
    Returns (N, Cout + Cs, 2H, 2W)."""
    # TODO(synk): training-time Dropout (dropout > 0) path is not implemented (module default 0.0).
    N, Cin, H, W = x.shape
    Cout = weight.shape[1]
    HW = H * W

    # Cin padded to the MXU-dtype sublane granule (16 for bf16, 8 for f32).
    granule = 16 if jnp.dtype(mxu_dtype).itemsize == 2 else 8
    cin_p = ((Cin + granule - 1) // granule) * granule

    # Cout tile / batch block; both grid axes are fully independent ("parallel").
    tc = _pick_cout_tile(Cout)
    n_ct = Cout // tc
    nb = _largest_divisor_le(N, max(1, min(8, 32768 // max(HW, 1))))
    if (N // nb) * n_ct < 2 and nb > 1:       # keep >= 2 grid steps so v7x's 2 TCs both work
        nb = _largest_divisor_le(N, nb - 1)
    n_bt = N // nb

    x_flat = x.reshape(N, Cin, HW).astype(mxu_dtype)
    if cin_p != Cin:
        x_flat = jnp.pad(x_flat, ((0, 0), (0, cin_p - Cin), (0, 0)))

    # Weight stack: (phase, rows ordered [cout_tile, tap, co_within_tile], cin_p).
    wt = jnp.transpose(weight, (2, 3, 1, 0))            # (kh, kw, Cout, Cin)
    if cin_p != Cin:
        wt = jnp.pad(wt, ((0, 0), (0, 0), (0, 0), (0, cin_p - Cin)))
    phases = _phase_taps()
    w_blocks = []
    for p in range(4):
        per = jnp.stack([wt[kh, kw] for ((kh, kw), _) in phases[p]], axis=0)  # (4, Cout, cin_p)
        per = per.reshape(4, n_ct, tc, cin_p).transpose(1, 0, 2, 3).reshape(4 * Cout, cin_p)
        w_blocks.append(per)
    w_stack = jnp.stack(w_blocks, axis=0).astype(mxu_dtype)                   # (4, 4*Cout, cin_p)

    # VMEM budget (double-buffered ins/outs + scratch + working set), capped for v7x.
    itm = jnp.dtype(mxu_dtype).itemsize
    need = (2 * (nb * cin_p * HW * itm + 16 * tc * cin_p * itm + nb * 2 * tc * HW * 4)
            + 4 * tc * HW * 4 + 10 * tc * HW * 4)
    vmem_limit = int(min(max(2 * need, 16 * 2 ** 20), 48 * 2 ** 20))

    out_u32 = pl.pallas_call(
        _make_kernel(nb, tc, H, W, _LOW_IS_ELEMENT0),
        out_shape=jax.ShapeDtypeStruct((N, 2, Cout, HW), jnp.uint32),
        grid_spec=pltpu.PrefetchScalarGridSpec(
            num_scalar_prefetch=0,
            grid=(n_bt, n_ct),
            in_specs=[
                pl.BlockSpec((nb, cin_p, HW), lambda bi, ci: (bi, 0, 0)),
                pl.BlockSpec((4, 4 * tc, cin_p), lambda bi, ci: (0, ci, 0)),
            ],
            out_specs=pl.BlockSpec((nb, 2, tc, HW), lambda bi, ci: (bi, 0, ci, 0)),
            scratch_shapes=[pltpu.VMEM((4, tc, HW), jnp.float32)],
        ),
        compiler_params=pltpu.CompilerParams(
            dimension_semantics=("parallel", "parallel"),
            vmem_limit_bytes=vmem_limit),
    )(x_flat, w_stack)

    # u32 -> two bf16 lanes (pw interleave already baked into each u32), then one
    # row-granular (2W-contiguous) ph transpose + free reshapes.  No size-2-minor transpose.
    y = lax.bitcast_convert_type(out_u32, jnp.bfloat16)           # (N, 2, Cout, HW, 2)
    y = y.reshape(N, 2, Cout, H, W, 2)
    y = jnp.transpose(y, (0, 2, 3, 1, 4, 5))                      # (N, Cout, H, 2, W, 2)
    y = y.reshape(N, Cout, 2 * H, 2 * W).astype(out_dtype)
    return jnp.concatenate([y, skip.astype(out_dtype)], axis=1)


def reference(x, skip, weight):
    """Pure-JAX reference of the PyTorch forward (correctness check only)."""
    w_conv = jnp.transpose(weight[:, :, ::-1, ::-1], (1, 0, 2, 3))  # OIHW, spatially flipped
    y = lax.conv_general_dilated(
        x, w_conv, window_strides=(1, 1), padding=((2, 2), (2, 2)),
        lhs_dilation=(2, 2), dimension_numbers=("NCHW", "OIHW", "NCHW"))
    mean = jnp.mean(y, axis=(2, 3), keepdims=True)
    var = jnp.mean((y - mean) ** 2, axis=(2, 3), keepdims=True)
    y = jnp.maximum((y - mean) * lax.rsqrt(var + EPS), 0.0)
    return jnp.concatenate([y, skip], axis=1)


if __name__ == "__main__":
    key = jax.random.PRNGKey(0)
    k1, k2, k3 = jax.random.split(key, 3)

    N, Cin, H, W = 2, 8, 16, 16       # in_size = 8, spatial 16 -> output 32x32
    Cout = 8                          # out_size = 8
    Cs = Cout                         # typical UNet skip channel count

    x = jax.random.normal(k1, (N, Cin, H, W), jnp.float32)
    skip = jax.random.normal(k2, (N, Cs, 2 * H, 2 * W), jnp.float32)
    weight = 0.1 * jax.random.normal(k3, (Cin, Cout, 4, 4), jnp.float32)

    ref = reference(x, skip, weight)

    # f32 MXU operands: only bf16 output/skip rounding remains vs. the f32 reference.
    out_f32 = unet_up_nobp(x, skip, weight, mxu_dtype=jnp.float32)
    jax.block_until_ready(out_f32)
    assert out_f32.shape == (N, Cout + Cs, 2 * H, 2 * W), out_f32.shape
    err32 = float(jnp.max(jnp.abs(out_f32.astype(jnp.float32) - ref)))
    assert jnp.allclose(out_f32.astype(jnp.float32), ref, atol=2e-2, rtol=2e-2), err32

    # Fast path: bf16 MXU operands, f32 accumulation + f32 InstanceNorm, bf16 output.
    out_bf16 = unet_up_nobp(x, skip, weight, mxu_dtype=jnp.bfloat16)
    jax.block_until_ready(out_bf16)
    errbf = float(jnp.max(jnp.abs(out_bf16.astype(jnp.float32) - ref)))
    assert jnp.allclose(out_bf16.astype(jnp.float32), ref, atol=6e-2, rtol=6e-2), errbf

    print("KERNEL_OK")
</pallas_src>

<mosaic_0001>
module attributes {stable_mosaic.version = 11 : i64} {
  func.func @kernel(%arg0: i32, %arg1: i32, %arg2: memref<1x8x256xf32, #tpu.memory_space<vmem>>, %arg3: memref<4x32x8xf32, #tpu.memory_space<vmem>>, %arg4: memref<1x2x8x256xi32, #tpu.memory_space<vmem>>, %arg5: memref<4x8x256xf32, #tpu.memory_space<vmem>>) attributes {dimension_semantics = [#tpu.dimension_semantics<parallel>, #tpu.dimension_semantics<parallel>], iteration_bounds = array<i64: 2, 1>, scalar_prefetch = 0 : i64, scratch_operands = 1 : i64, tpu.core_type = #tpu.core_type<tc>, window_params = [{transform_indices = @transform_0, window_bounds = array<i64: 1, 8, 256>}, {transform_indices = @transform_1, window_bounds = array<i64: 4, 32, 8>}, {transform_indices = @transform_2, window_bounds = array<i64: 1, 2, 8, 256>}]} {
    %0 = tpu.iota {dimensions = array<i32: 1>} : vector<1x256xi32>
    %c15_i32 = arith.constant 15 : i32
    %1 = vector.broadcast %c15_i32 : i32 to vector<1x256xi32>
    %2 = arith.andi %0, %1 : vector<1x256xi32>
    %c16_i32 = arith.constant 16 : i32
    %3 = vector.broadcast %c16_i32 : i32 to vector<1x256xi32>
    %4 = arith.cmpi sge, %0, %3 : vector<1x256xi32>
    %c240_i32 = arith.constant 240 : i32
    %5 = vector.broadcast %c240_i32 : i32 to vector<1x256xi32>
    %6 = arith.cmpi slt, %0, %5 : vector<1x256xi32>
    %c1_i32 = arith.constant 1 : i32
    %7 = vector.broadcast %c1_i32 : i32 to vector<1x256xi32>
    %8 = arith.cmpi sge, %2, %7 : vector<1x256xi32>
    %c14_i32 = arith.constant 14 : i32
    %9 = vector.broadcast %c14_i32 : i32 to vector<1x256xi32>
    %10 = arith.cmpi sle, %2, %9 : vector<1x256xi32>
    %11 = arith.andi %4, %8 : vector<1x256xi1>
    %12 = arith.andi %4, %10 : vector<1x256xi1>
    %13 = arith.andi %6, %8 : vector<1x256xi1>
    %14 = arith.andi %6, %10 : vector<1x256xi1>
    %c0 = arith.constant 0 : index
    %c0_0 = arith.constant 0 : index
    %c0_1 = arith.constant 0 : index
    %15 = vector.load %arg2[%c0, %c0_0, %c0_1] : memref<1x8x256xf32, #tpu.memory_space<vmem>>, vector<1x8x256xf32>
    %16 = vector.shape_cast %15 : vector<1x8x256xf32> to vector<8x256xf32>
    %cst = arith.constant 0.000000e+00 : f32
    %17 = vector.broadcast %cst : f32 to vector<8x1xf32>
    %c0_2 = arith.constant 0 : index
    %c0_3 = arith.constant 0 : index
    %c0_4 = arith.constant 0 : index
    %18 = vector.load %arg3[%c0_2, %c0_3, %c0_4] : memref<4x32x8xf32, #tpu.memory_space<vmem>>, vector<1x32x8xf32>
    %19 = vector.shape_cast %18 : vector<1x32x8xf32> to vector<32x8xf32>
    %cst_5 = arith.constant dense<0.000000e+00> : vector<32x256xf32>
    %20 = tpu.matmul %19, %16, %cst_5 {dimension_numbers = #tpu.dot_dimension_numbers<[1], [0], [0], [1], [0, 0, 1, 1], [], []>} : vector<32x8xf32>, vector<8x256xf32>, vector<32x256xf32> -> vector<32x256xf32>
    %21 = vector.extract_strided_slice %20 {offsets = [0, 0], sizes = [8, 256], strides = [1, 1]} : vector<32x256xf32> to vector<8x256xf32>
    %22 = vector.extract_strided_slice %20 {offsets = [8, 0], sizes = [8, 256], strides = [1, 1]} : vector<32x256xf32> to vector<8x256xf32>
    %c1_i32_6 = arith.constant 1 : i32
    %23 = tpu.dynamic_rotate %22 by %c1_i32_6 dim 1 : vector<8x256xf32>, i32 -> vector<8x256xf32>
    %cst_7 = arith.constant 0.000000e+00 : f32
    %24 = vector.shape_cast %8 : vector<1x256xi1> to vector<1x256xi1>
    %25 = vector.broadcast %24 : vector<1x256xi1> to vector<8x256xi1>
    %26 = vector.broadcast %cst_7 : f32 to vector<8x256xf32>
    %27 = arith.select %25, %23, %26 : vector<8x256xi1>, vector<8x256xf32>
    %28 = arith.addf %21, %27 : vector<8x256xf32>
    %29 = vector.extract_strided_slice %20 {offsets = [16, 0], sizes = [8, 256], strides = [1, 1]} : vector<32x256xf32> to vector<8x256xf32>
    %c16_i32_8 = arith.constant 16 : i32
    %30 = tpu.dynamic_rotate %29 by %c16_i32_8 dim 1 : vector<8x256xf32>, i32 -> vector<8x256xf32>
    %cst_9 = arith.constant 0.000000e+00 : f32
    %31 = vector.shape_cast %4 : vector<1x256xi1> to vector<1x256xi1>
    %32 = vector.broadcast %31 : vector<1x256xi1> to vector<8x256xi1>
    %33 = vector.broadcast %cst_9 : f32 to vector<8x256xf32>
    %34 = arith.select %32, %30, %33 : vector<8x256xi1>, vector<8x256xf32>
    %35 = arith.addf %28, %34 : vector<8x256xf32>
    %36 = vector.extract_strided_slice %20 {offsets = [24, 0], sizes = [8, 256], strides = [1, 1]} : vector<32x256xf32> to vector<8x256xf32>
    %c17_i32 = arith.constant 17 : i32
    %37 = tpu.dynamic_rotate %36 by %c17_i32 dim 1 : vector<8x256xf32>, i32 -> vector<8x256xf32>
    %cst_10 = arith.constant 0.000000e+00 : f32
    %38 = vector.shape_cast %11 : vector<1x256xi1> to vector<1x256xi1>
    %39 = vector.broadcast %38 : vector<1x256xi1> to vector<8x256xi1>
    %40 = vector.broadcast %cst_10 : f32 to vector<8x256xf32>
    %41 = arith.select %39, %37, %40 : vector<8x256xi1>, vector<8x256xf32>
    %42 = arith.addf %35, %41 : vector<8x256xf32>
    %c0_11 = arith.constant 0 : index
    %c0_12 = arith.constant 0 : index
    %c0_13 = arith.constant 0 : index
    %43 = vector.load %arg5[%c0_11, %c0_12, %c0_13] : memref<4x8x256xf32, #tpu.memory_space<vmem>>, vector<1x8x256xf32>
    %44 = vector.shape_cast %43 : vector<1x8x256xf32> to vector<8x256xf32>
    %45 = vector.shape_cast %42 : vector<8x256xf32> to vector<1x8x256xf32>
    tpu.vector_store %arg5[%c0_11, %c0_12, %c0_13], %45 {strides = array<i32>} : memref<4x8x256xf32, #tpu.memory_space<vmem>>, vector<1x8x256xf32>,
    %cst_14 = arith.constant dense<0.000000e+00> : vector<8xf32>
    %46 = vector.multi_reduction <add>, %42, %cst_14 [1] : vector<8x256xf32> to vector<8xf32>
    %47 = vector.shape_cast %46 : vector<8xf32> to vector<8x1xf32>
    %48 = arith.addf %17, %47 : vector<8x1xf32>
    %c1 = arith.constant 1 : index
    %c0_15 = arith.constant 0 : index
    %c0_16 = arith.constant 0 : index
    %49 = vector.load %arg3[%c1, %c0_15, %c0_16] : memref<4x32x8xf32, #tpu.memory_space<vmem>>, vector<1x32x8xf32>
    %50 = vector.shape_cast %49 : vector<1x32x8xf32> to vector<32x8xf32>
    %cst_17 = arith.constant dense<0.000000e+00> : vector<32x256xf32>
    %51 = tpu.matmul %50, %16, %cst_17 {dimension_numbers = #tpu.dot_dimension_numbers<[1], [0], [0], [1], [0, 0, 1, 1], [], []>} : vector<32x8xf32>, vector<8x256xf32>, vector<32x256xf32> -> vector<32x256xf32>
    %52 = vector.extract_strided_slice %51 {offsets = [0, 0], sizes = [8, 256], strides = [1, 1]} : vector<32x256xf32> to vector<8x256xf32>
    %53 = vector.extract_strided_slice %51 {offsets = [8, 0], sizes = [8, 256], strides = [1, 1]} : vector<32x256xf32> to vector<8x256xf32>
    %c255_i32 = arith.constant 255 : i32
    %54 = tpu.dynamic_rotate %53 by %c255_i32 dim 1 : vector<8x256xf32>, i32 -> vector<8x256xf32>
    %cst_18 = arith.constant 0.000000e+00 : f32
    %55 = vector.shape_cast %10 : vector<1x256xi1> to vector<1x256xi1>
    %56 = vector.broadcast %55 : vector<1x256xi1> to vector<8x256xi1>
    %57 = vector.broadcast %cst_18 : f32 to vector<8x256xf32>
    %58 = arith.select %56, %54, %57 : vector<8x256xi1>, vector<8x256xf32>
    %59 = arith.addf %52, %58 : vector<8x256xf32>
    %60 = vector.extract_strided_slice %51 {offsets = [16, 0], sizes = [8, 256], strides = [1, 1]} : vector<32x256xf32> to vector<8x256xf32>
    %c16_i32_19 = arith.constant 16 : i32
    %61 = tpu.dynamic_rotate %60 by %c16_i32_19 dim 1 : vector<8x256xf32>, i32 -> vector<8x256xf32>
    %cst_20 = arith.constant 0.000000e+00 : f32
    %62 = vector.shape_cast %4 : vector<1x256xi1> to vector<1x256xi1>
    %63 = vector.broadcast %62 : vector<1x256xi1> to vector<8x256xi1>
    %64 = vector.broadcast %cst_20 : f32 to vector<8x256xf32>
    %65 = arith.select %63, %61, %64 : vector<8x256xi1>, vector<8x256xf32>
    %66 = arith.addf %59, %65 : vector<8x256xf32>
    %67 = vector.extract_strided_slice %51 {offsets = [24, 0], sizes = [8, 256], strides = [1, 1]} : vector<32x256xf32> to vector<8x256xf32>
    %c15_i32_21 = arith.constant 15 : i32
    %68 = tpu.dynamic_rotate %67 by %c15_i32_21 dim 1 : vector<8x256xf32>, i32 -> vector<8x256xf32>
    %cst_22 = arith.constant 0.000000e+00 : f32
    %69 = vector.shape_cast %12 : vector<1x256xi1> to vector<1x256xi1>
    %70 = vector.broadcast %69 : vector<1x256xi1> to vector<8x256xi1>
    %71 = vector.broadcast %cst_22 : f32 to vector<8x256xf32>
    %72 = arith.select %70, %68, %71 : vector<8x256xi1>, vector<8x256xf32>
    %73 = arith.addf %66, %72 : vector<8x256xf32>
    %c1_23 = arith.constant 1 : index
    %c0_24 = arith.constant 0 : index
    %c0_25 = arith.constant 0 : index
    %74 = vector.load %arg5[%c1_23, %c0_24, %c0_25] : memref<4x8x256xf32, #tpu.memory_space<vmem>>, vector<1x8x256xf32>
    %75 = vector.shape_cast %74 : vector<1x8x256xf32> to vector<8x256xf32>
    %76 = vector.shape_cast %73 : vector<8x256xf32> to vector<1x8x256xf32>
    tpu.vector_store %arg5[%c1_23, %c0_24, %c0_25], %76 {strides = array<i32>} : memref<4x8x256xf32, #tpu.memory_space<vmem>>, vector<1x8x256xf32>,
    %cst_26 = arith.constant dense<0.000000e+00> : vector<8xf32>
    %77 = vector.multi_reduction <add>, %73, %cst_26 [1] : vector<8x256xf32> to vector<8xf32>
    %78 = vector.shape_cast %77 : vector<8xf32> to vector<8x1xf32>
    %79 = arith.addf %48, %78 : vector<8x1xf32>
    %c2 = arith.constant 2 : index
    %c0_27 = arith.constant 0 : index
    %c0_28 = arith.constant 0 : index
    %80 = vector.load %arg3[%c2, %c0_27, %c0_28] : memref<4x32x8xf32, #tpu.memory_space<vmem>>, vector<1x32x8xf32>
    %81 = vector.shape_cast %80 : vector<1x32x8xf32> to vector<32x8xf32>
    %cst_29 = arith.constant dense<0.000000e+00> : vector<32x256xf32>
    %82 = tpu.matmul %81, %16, %cst_29 {dimension_numbers = #tpu.dot_dimension_numbers<[1], [0], [0], [1], [0, 0, 1, 1], [], []>} : vector<32x8xf32>, vector<8x256xf32>, vector<32x256xf32> -> vector<32x256xf32>
    %83 = vector.extract_strided_slice %82 {offsets = [0, 0], sizes = [8, 256], strides = [1, 1]} : vector<32x256xf32> to vector<8x256xf32>
    %84 = vector.extract_strided_slice %82 {offsets = [8, 0], sizes = [8, 256], strides = [1, 1]} : vector<32x256xf32> to vector<8x256xf32>
    %c1_i32_30 = arith.constant 1 : i32
    %85 = tpu.dynamic_rotate %84 by %c1_i32_30 dim 1 : vector<8x256xf32>, i32 -> vector<8x256xf32>
    %cst_31 = arith.constant 0.000000e+00 : f32
    %86 = vector.shape_cast %8 : vector<1x256xi1> to vector<1x256xi1>
    %87 = vector.broadcast %86 : vector<1x256xi1> to vector<8x256xi1>
    %88 = vector.broadcast %cst_31 : f32 to vector<8x256xf32>
    %89 = arith.select %87, %85, %88 : vector<8x256xi1>, vector<8x256xf32>
    %90 = arith.addf %83, %89 : vector<8x256xf32>
    %91 = vector.extract_strided_slice %82 {offsets = [16, 0], sizes = [8, 256], strides = [1, 1]} : vector<32x256xf32> to vector<8x256xf32>
    %c240_i32_32 = arith.constant 240 : i32
    %92 = tpu.dynamic_rotate %91 by %c240_i32_32 dim 1 : vector<8x256xf32>, i32 -> vector<8x256xf32>
    %cst_33 = arith.constant 0.000000e+00 : f32
    %93 = vector.shape_cast %6 : vector<1x256xi1> to vector<1x256xi1>
    %94 = vector.broadcast %93 : vector<1x256xi1> to vector<8x256xi1>
    %95 = vector.broadcast %cst_33 : f32 to vector<8x256xf32>
    %96 = arith.select %94, %92, %95 : vector<8x256xi1>, vector<8x256xf32>
    %97 = arith.addf %90, %96 : vector<8x256xf32>
    %98 = vector.extract_strided_slice %82 {offsets = [24, 0], sizes = [8, 256], strides = [1, 1]} : vector<32x256xf32> to vector<8x256xf32>
    %c241_i32 = arith.constant 241 : i32
    %99 = tpu.dynamic_rotate %98 by %c241_i32 dim 1 : vector<8x256xf32>, i32 -> vector<8x256xf32>
    %cst_34 = arith.constant 0.000000e+00 : f32
    %100 = vector.shape_cast %13 : vector<1x256xi1> to vector<1x256xi1>
    %101 = vector.broadcast %100 : vector<1x256xi1> to vector<8x256xi1>
    %102 = vector.broadcast %cst_34 : f32 to vector<8x256xf32>
    %103 = arith.select %101, %99, %102 : vector<8x256xi1>, vector<8x256xf32>
    %104 = arith.addf %97, %103 : vector<8x256xf32>
    %c2_35 = arith.constant 2 : index
    %c0_36 = arith.constant 0 : index
    %c0_37 = arith.constant 0 : index
    %105 = vector.load %arg5[%c2_35, %c0_36, %c0_37] : memref<4x8x256xf32, #tpu.memory_space<vmem>>, vector<1x8x256xf32>
    %106 = vector.shape_cast %105 : vector<1x8x256xf32> to vector<8x256xf32>
    %107 = vector.shape_cast %104 : vector<8x256xf32> to vector<1x8x256xf32>
    tpu.vector_store %arg5[%c2_35, %c0_36, %c0_37], %107 {strides = array<i32>} : memref<4x8x256xf32, #tpu.memory_space<vmem>>, vector<1x8x256xf32>,
    %cst_38 = arith.constant dense<0.000000e+00> : vector<8xf32>
    %108 = vector.multi_reduction <add>, %104, %cst_38 [1] : vector<8x256xf32> to vector<8xf32>
    %109 = vector.shape_cast %108 : vector<8xf32> to vector<8x1xf32>
    %110 = arith.addf %79, %109 : vector<8x1xf32>
    %c3 = arith.constant 3 : index
    %c0_39 = arith.constant 0 : index
    %c0_40 = arith.constant 0 : index
    %111 = vector.load %arg3[%c3, %c0_39, %c0_40] : memref<4x32x8xf32, #tpu.memory_space<vmem>>, vector<1x32x8xf32>
    %112 = vector.shape_cast %111 : vector<1x32x8xf32> to vector<32x8xf32>
    %cst_41 = arith.constant dense<0.000000e+00> : vector<32x256xf32>
    %113 = tpu.matmul %112, %16, %cst_41 {dimension_numbers = #tpu.dot_dimension_numbers<[1], [0], [0], [1], [0, 0, 1, 1], [], []>} : vector<32x8xf32>, vector<8x256xf32>, vector<32x256xf32> -> vector<32x256xf32>
    %114 = vector.extract_strided_slice %113 {offsets = [0, 0], sizes = [8, 256], strides = [1, 1]} : vector<32x256xf32> to vector<8x256xf32>
    %115 = vector.extract_strided_slice %113 {offsets = [8, 0], sizes = [8, 256], strides = [1, 1]} : vector<32x256xf32> to vector<8x256xf32>
    %c255_i32_42 = arith.constant 255 : i32
    %116 = tpu.dynamic_rotate %115 by %c255_i32_42 dim 1 : vector<8x256xf32>, i32 -> vector<8x256xf32>
    %cst_43 = arith.constant 0.000000e+00 : f32
    %117 = vector.shape_cast %10 : vector<1x256xi1> to vector<1x256xi1>
    %118 = vector.broadcast %117 : vector<1x256xi1> to vector<8x256xi1>
    %119 = vector.broadcast %cst_43 : f32 to vector<8x256xf32>
    %120 = arith.select %118, %116, %119 : vector<8x256xi1>, vector<8x256xf32>
    %121 = arith.addf %114, %120 : vector<8x256xf32>
    %122 = vector.extract_strided_slice %113 {offsets = [16, 0], sizes = [8, 256], strides = [1, 1]} : vector<32x256xf32> to vector<8x256xf32>
    %c240_i32_44 = arith.constant 240 : i32
    %123 = tpu.dynamic_rotate %122 by %c240_i32_44 dim 1 : vector<8x256xf32>, i32 -> vector<8x256xf32>
    %cst_45 = arith.constant 0.000000e+00 : f32
    %124 = vector.shape_cast %6 : vector<1x256xi1> to vector<1x256xi1>
    %125 = vector.broadcast %124 : vector<1x256xi1> to vector<8x256xi1>
    %126 = vector.broadcast %cst_45 : f32 to vector<8x256xf32>
    %127 = arith.select %125, %123, %126 : vector<8x256xi1>, vector<8x256xf32>
    %128 = arith.addf %121, %127 : vector<8x256xf32>
    %129 = vector.extract_strided_slice %113 {offsets = [24, 0], sizes = [8, 256], strides = [1, 1]} : vector<32x256xf32> to vector<8x256xf32>
    %c239_i32 = arith.constant 239 : i32
    %130 = tpu.dynamic_rotate %129 by %c239_i32 dim 1 : vector<8x256xf32>, i32 -> vector<8x256xf32>
    %cst_46 = arith.constant 0.000000e+00 : f32
    %131 = vector.shape_cast %14 : vector<1x256xi1> to vector<1x256xi1>
    %132 = vector.broadcast %131 : vector<1x256xi1> to vector<8x256xi1>
    %133 = vector.broadcast %cst_46 : f32 to vector<8x256xf32>
    %134 = arith.select %132, %130, %133 : vector<8x256xi1>, vector<8x256xf32>
    %135 = arith.addf %128, %134 : vector<8x256xf32>
    %c3_47 = arith.constant 3 : index
    %c0_48 = arith.constant 0 : index
    %c0_49 = arith.constant 0 : index
    %136 = vector.load %arg5[%c3_47, %c0_48, %c0_49] : memref<4x8x256xf32, #tpu.memory_space<vmem>>, vector<1x8x256xf32>
    %137 = vector.shape_cast %136 : vector<1x8x256xf32> to vector<8x256xf32>
    %138 = vector.shape_cast %135 : vector<8x256xf32> to vector<1x8x256xf32>
    tpu.vector_store %arg5[%c3_47, %c0_48, %c0_49], %138 {strides = array<i32>} : memref<4x8x256xf32, #tpu.memory_space<vmem>>, vector<1x8x256xf32>,
    %cst_50 = arith.constant dense<0.000000e+00> : vector<8xf32>
    %139 = vector.multi_reduction <add>, %135, %cst_50 [1] : vector<8x256xf32> to vector<8xf32>
    %140 = vector.shape_cast %139 : vector<8xf32> to vector<8x1xf32>
    %141 = arith.addf %110, %140 : vector<8x1xf32>
    %cst_51 = arith.constant 9.765625E-4 : f32
    %142 = vector.broadcast %cst_51 : f32 to vector<8x1xf32>
    %143 = arith.mulf %141, %142 : vector<8x1xf32>
    %cst_52 = arith.constant 0.000000e+00 : f32
    %144 = vector.broadcast %cst_52 : f32 to vector<8x1xf32>
    %c0_53 = arith.constant 0 : index
    %c0_54 = arith.constant 0 : index
    %c0_55 = arith.constant 0 : index
    %145 = vector.load %arg5[%c0_53, %c0_54, %c0_55] : memref<4x8x256xf32, #tpu.memory_space<vmem>>, vector<1x8x256xf32>
    %146 = vector.shape_cast %145 : vector<1x8x256xf32> to vector<8x256xf32>
    %147 = vector.broadcast %143 : vector<8x1xf32> to vector<8x256xf32>
    %148 = arith.subf %146, %147 : vector<8x256xf32>
    %149 = arith.mulf %148, %148 : vector<8x256xf32>
    %cst_56 = arith.constant dense<0.000000e+00> : vector<8xf32>
    %150 = vector.multi_reduction <add>, %149, %cst_56 [1] : vector<8x256xf32> to vector<8xf32>
    %151 = vector.shape_cast %150 : vector<8xf32> to vector<8x1xf32>
    %152 = arith.addf %144, %151 : vector<8x1xf32>
    %c1_57 = arith.constant 1 : index
    %c0_58 = arith.constant 0 : index
    %c0_59 = arith.constant 0 : index
    %153 = vector.load %arg5[%c1_57, %c0_58, %c0_59] : memref<4x8x256xf32, #tpu.memory_space<vmem>>, vector<1x8x256xf32>
    %154 = vector.shape_cast %153 : vector<1x8x256xf32> to vector<8x256xf32>
    %155 = vector.broadcast %143 : vector<8x1xf32> to vector<8x256xf32>
    %156 = arith.subf %154, %155 : vector<8x256xf32>
    %157 = arith.mulf %156, %156 : vector<8x256xf32>
    %cst_60 = arith.constant dense<0.000000e+00> : vector<8xf32>
    %158 = vector.multi_reduction <add>, %157, %cst_60 [1] : vector<8x256xf32> to vector<8xf32>
    %159 = vector.shape_cast %158 : vector<8xf32> to vector<8x1xf32>
    %160 = arith.addf %152, %159 : vector<8x1xf32>
    %c2_61 = arith.constant 2 : index
    %c0_62 = arith.constant 0 : index
    %c0_63 = arith.constant 0 : index
    %161 = vector.load %arg5[%c2_61, %c0_62, %c0_63] : memref<4x8x256xf32, #tpu.memory_space<vmem>>, vector<1x8x256xf32>
    %162 = vector.shape_cast %161 : vector<1x8x256xf32> to vector<8x256xf32>
    %163 = vector.broadcast %143 : vector<8x1xf32> to vector<8x256xf32>
    %164 = arith.subf %162, %163 : vector<8x256xf32>
    %165 = arith.mulf %164, %164 : vector<8x256xf32>
    %cst_64 = arith.constant dense<0.000000e+00> : vector<8xf32>
    %166 = vector.multi_reduction <add>, %165, %cst_64 [1] : vector<8x256xf32> to vector<8xf32>
    %167 = vector.shape_cast %166 : vector<8xf32> to vector<8x1xf32>
    %168 = arith.addf %160, %167 : vector<8x1xf32>
    %c3_65 = arith.constant 3 : index
    %c0_66 = arith.constant 0 : index
    %c0_67 = arith.constant 0 : index
    %169 = vector.load %arg5[%c3_65, %c0_66, %c0_67] : memref<4x8x256xf32, #tpu.memory_space<vmem>>, vector<1x8x256xf32>
    %170 = vector.shape_cast %169 : vector<1x8x256xf32> to vector<8x256xf32>
    %171 = vector.broadcast %143 : vector<8x1xf32> to vector<8x256xf32>
    %172 = arith.subf %170, %171 : vector<8x256xf32>
    %173 = arith.mulf %172, %172 : vector<8x256xf32>
    %cst_68 = arith.constant dense<0.000000e+00> : vector<8xf32>
    %174 = vector.multi_reduction <add>, %173, %cst_68 [1] : vector<8x256xf32> to vector<8xf32>
    %175 = vector.shape_cast %174 : vector<8xf32> to vector<8x1xf32>
    %176 = arith.addf %168, %175 : vector<8x1xf32>
    %cst_69 = arith.constant 9.765625E-4 : f32
    %177 = vector.broadcast %cst_69 : f32 to vector<8x1xf32>
    %178 = arith.mulf %176, %177 : vector<8x1xf32>
    %cst_70 = arith.constant 9.99999974E-6 : f32
    %179 = vector.broadcast %cst_70 : f32 to vector<8x1xf32>
    %180 = arith.addf %178, %179 : vector<8x1xf32>
    %181 = math.rsqrt %180 : vector<8x1xf32>
    %c0_71 = arith.constant 0 : index
    %c0_72 = arith.constant 0 : index
    %c0_73 = arith.constant 0 : index
    %182 = vector.load %arg5[%c0_71, %c0_72, %c0_73] : memref<4x8x256xf32, #tpu.memory_space<vmem>>, vector<1x8x256xf32>
    %183 = vector.shape_cast %182 : vector<1x8x256xf32> to vector<8x256xf32>
    %184 = vector.broadcast %143 : vector<8x1xf32> to vector<8x256xf32>
    %185 = arith.subf %183, %184 : vector<8x256xf32>
    %186 = vector.broadcast %181 : vector<8x1xf32> to vector<8x256xf32>
    %187 = arith.mulf %185, %186 : vector<8x256xf32>
    %cst_74 = arith.constant 0.000000e+00 : f32
    %188 = vector.broadcast %cst_74 : f32 to vector<8x256xf32>
    %189 = arith.maximumf %187, %188 : vector<8x256xf32>
    %c1_75 = arith.constant 1 : index
    %c0_76 = arith.constant 0 : index
    %c0_77 = arith.constant 0 : index
    %190 = vector.load %arg5[%c1_75, %c0_76, %c0_77] : memref<4x8x256xf32, #tpu.memory_space<vmem>>, vector<1x8x256xf32>
    %191 = vector.shape_cast %190 : vector<1x8x256xf32> to vector<8x256xf32>
    %192 = vector.broadcast %143 : vector<8x1xf32> to vector<8x256xf32>
    %193 = arith.subf %191, %192 : vector<8x256xf32>
    %194 = vector.broadcast %181 : vector<8x1xf32> to vector<8x256xf32>
    %195 = arith.mulf %193, %194 : vector<8x256xf32>
    %cst_78 = arith.constant 0.000000e+00 : f32
    %196 = vector.broadcast %cst_78 : f32 to vector<8x256xf32>
    %197 = arith.maximumf %195, %196 : vector<8x256xf32>
    %198 = tpu.bitcast %189 : vector<8x256xf32> -> vector<8x256xi32>
    %c32767_i32 = arith.constant 32767 : i32
    %199 = vector.broadcast %c32767_i32 : i32 to vector<8x256xi32>
    %200 = arith.addi %198, %199 : vector<8x256xi32>
    %c16_i32_79 = arith.constant 16 : i32
    %201 = vector.broadcast %c16_i32_79 : i32 to vector<8x256xi32>
    %202 = arith.shrui %198, %201 : vector<8x256xi32>
    %c1_i32_80 = arith.constant 1 : i32
    %203 = vector.broadcast %c1_i32_80 : i32 to vector<8x256xi32>
    %204 = arith.andi %202, %203 : vector<8x256xi32>
    %205 = arith.addi %200, %204 : vector<8x256xi32>
    %c16_i32_81 = arith.constant 16 : i32
    %206 = vector.broadcast %c16_i32_81 : i32 to vector<8x256xi32>
    %207 = arith.shrui %205, %206 : vector<8x256xi32>
    %208 = tpu.bitcast %197 : vector<8x256xf32> -> vector<8x256xi32>
    %c32767_i32_82 = arith.constant 32767 : i32
    %209 = vector.broadcast %c32767_i32_82 : i32 to vector<8x256xi32>
    %210 = arith.addi %208, %209 : vector<8x256xi32>
    %c16_i32_83 = arith.constant 16 : i32
    %211 = vector.broadcast %c16_i32_83 : i32 to vector<8x256xi32>
    %212 = arith.shrui %208, %211 : vector<8x256xi32>
    %c1_i32_84 = arith.constant 1 : i32
    %213 = vector.broadcast %c1_i32_84 : i32 to vector<8x256xi32>
    %214 = arith.andi %212, %213 : vector<8x256xi32>
    %215 = arith.addi %210, %214 : vector<8x256xi32>
    %c16_i32_85 = arith.constant 16 : i32
    %216 = vector.broadcast %c16_i32_85 : i32 to vector<8x256xi32>
    %217 = arith.shrui %215, %216 : vector<8x256xi32>
    %c16_i32_86 = arith.constant 16 : i32
    %218 = vector.broadcast %c16_i32_86 : i32 to vector<8x256xi32>
    %219 = arith.shli %217, %218 : vector<8x256xi32>
    %220 = arith.ori %207, %219 : vector<8x256xi32>
    %c0_87 = arith.constant 0 : index
    %c0_88 = arith.constant 0 : index
    %c0_89 = arith.constant 0 : index
    %c0_90 = arith.constant 0 : index
    %221 = vector.load %arg4[%c0_87, %c0_88, %c0_89, %c0_90] : memref<1x2x8x256xi32, #tpu.memory_space<vmem>>, vector<1x1x8x256xi32>
    %222 = vector.shape_cast %221 : vector<1x1x8x256xi32> to vector<8x256xi32>
    %223 = vector.shape_cast %220 : vector<8x256xi32> to vector<1x1x8x256xi32>
    tpu.vector_store %arg4[%c0_87, %c0_88, %c0_89, %c0_90], %223 {strides = array<i32>} : memref<1x2x8x256xi32, #tpu.memory_space<vmem>>, vector<1x1x8x256xi32>,
    %c2_91 = arith.constant 2 : index
    %c0_92 = arith.constant 0 : index
    %c0_93 = arith.constant 0 : index
    %224 = vector.load %arg5[%c2_91, %c0_92, %c0_93] : memref<4x8x256xf32, #tpu.memory_space<vmem>>, vector<1x8x256xf32>
    %225 = vector.shape_cast %224 : vector<1x8x256xf32> to vector<8x256xf32>
    %226 = vector.broadcast %143 : vector<8x1xf32> to vector<8x256xf32>
    %227 = arith.subf %225, %226 : vector<8x256xf32>
    %228 = vector.broadcast %181 : vector<8x1xf32> to vector<8x256xf32>
    %229 = arith.mulf %227, %228 : vector<8x256xf32>
    %cst_94 = arith.constant 0.000000e+00 : f32
    %230 = vector.broadcast %cst_94 : f32 to vector<8x256xf32>
    %231 = arith.maximumf %229, %230 : vector<8x256xf32>
    %c3_95 = arith.constant 3 : index
    %c0_96 = arith.constant 0 : index
    %c0_97 = arith.constant 0 : index
    %232 = vector.load %arg5[%c3_95, %c0_96, %c0_97] : memref<4x8x256xf32, #tpu.memory_space<vmem>>, vector<1x8x256xf32>
    %233 = vector.shape_cast %232 : vector<1x8x256xf32> to vector<8x256xf32>
    %234 = vector.broadcast %143 : vector<8x1xf32> to vector<8x256xf32>
    %235 = arith.subf %233, %234 : vector<8x256xf32>
    %236 = vector.broadcast %181 : vector<8x1xf32> to vector<8x256xf32>
    %237 = arith.mulf %235, %236 : vector<8x256xf32>
    %cst_98 = arith.constant 0.000000e+00 : f32
    %238 = vector.broadcast %cst_98 : f32 to vector<8x256xf32>
    %239 = arith.maximumf %237, %238 : vector<8x256xf32>
    %240 = tpu.bitcast %231 : vector<8x256xf32> -> vector<8x256xi32>
    %c32767_i32_99 = arith.constant 32767 : i32
    %241 = vector.broadcast %c32767_i32_99 : i32 to vector<8x256xi32>
    %242 = arith.addi %240, %241 : vector<8x256xi32>
    %c16_i32_100 = arith.constant 16 : i32
    %243 = vector.broadcast %c16_i32_100 : i32 to vector<8x256xi32>
    %244 = arith.shrui %240, %243 : vector<8x256xi32>
    %c1_i32_101 = arith.constant 1 : i32
    %245 = vector.broadcast %c1_i32_101 : i32 to vector<8x256xi32>
    %246 = arith.andi %244, %245 : vector<8x256xi32>
    %247 = arith.addi %242, %246 : vector<8x256xi32>
    %c16_i32_102 = arith.constant 16 : i32
    %248 = vector.broadcast %c16_i32_102 : i32 to vector<8x256xi32>
    %249 = arith.shrui %247, %248 : vector<8x256xi32>
    %250 = tpu.bitcast %239 : vector<8x256xf32> -> vector<8x256xi32>
    %c32767_i32_103 = arith.constant 32767 : i32
    %251 = vector.broadcast %c32767_i32_103 : i32 to vector<8x256xi32>
    %252 = arith.addi %250, %251 : vector<8x256xi32>
    %c16_i32_104 = arith.constant 16 : i32
    %253 = vector.broadcast %c16_i32_104 : i32 to vector<8x256xi32>
    %254 = arith.shrui %250, %253 : vector<8x256xi32>
    %c1_i32_105 = arith.constant 1 : i32
    %255 = vector.broadcast %c1_i32_105 : i32 to vector<8x256xi32>
    %256 = arith.andi %254, %255 : vector<8x256xi32>
    %257 = arith.addi %252, %256 : vector<8x256xi32>
    %c16_i32_106 = arith.constant 16 : i32
    %258 = vector.broadcast %c16_i32_106 : i32 to vector<8x256xi32>
    %259 = arith.shrui %257, %258 : vector<8x256xi32>
    %c16_i32_107 = arith.constant 16 : i32
    %260 = vector.broadcast %c16_i32_107 : i32 to vector<8x256xi32>
    %261 = arith.shli %259, %260 : vector<8x256xi32>
    %262 = arith.ori %249, %261 : vector<8x256xi32>
    %c0_108 = arith.constant 0 : index
    %c1_109 = arith.constant 1 : index
    %c0_110 = arith.constant 0 : index
    %c0_111 = arith.constant 0 : index
    %263 = vector.load %arg4[%c0_108, %c1_109, %c0_110, %c0_111] : memref<1x2x8x256xi32, #tpu.memory_space<vmem>>, vector<1x1x8x256xi32>
    %264 = vector.shape_cast %263 : vector<1x1x8x256xi32> to vector<8x256xi32>
    %265 = vector.shape_cast %262 : vector<8x256xi32> to vector<1x1x8x256xi32>
    tpu.vector_store %arg4[%c0_108, %c1_109, %c0_110, %c0_111], %265 {strides = array<i32>} : memref<1x2x8x256xi32, #tpu.memory_space<vmem>>, vector<1x1x8x256xi32>,
    return
  }
  func.func @transform_0(%arg0: i32, %arg1: i32) -> (i32, i32, i32) {
    %c0_i32 = arith.constant 0 : i32
    %c0_i32_0 = arith.constant 0 : i32
    %c0_i32_1 = arith.constant 0 : i32
    return %arg0, %c0_i32, %c0_i32_0 : i32, i32, i32
  }
  func.func @transform_1(%arg0: i32, %arg1: i32) -> (i32, i32, i32) {
    %c0_i32 = arith.constant 0 : i32
    %c0_i32_0 = arith.constant 0 : i32
    %c0_i32_1 = arith.constant 0 : i32
    return %c0_i32, %arg1, %c0_i32_0 : i32, i32, i32
  }
  func.func @transform_2(%arg0: i32, %arg1: i32) -> (i32, i32, i32, i32) {
    %c0_i32 = arith.constant 0 : i32
    %c0_i32_0 = arith.constant 0 : i32
    %c0_i32_1 = arith.constant 0 : i32
    return %arg0, %c0_i32, %arg1, %c0_i32_0 : i32, i32, i32, i32
  }
}

</mosaic_0001>

<llo_original>
// kernel: tpu_custom_call.1
$region0: #{tpu_custom_call.1}
  #allocation0 [shape = 'u32[]', space=smem, size = 0x4, offset = 0x4, fixed_abs, tag = 'smem constant byte address 0x4 - core index']
  #allocation1 [shape = 'u32[72,128]{1,0:T(1,128)}', space=vmem, size = 0x9000, scoped, tag = 'internal scratch']
  #allocation2 [shape = 'f32[4,8,256]{2,1,0:T(8,128)}', space=vmem, size = 0x8000, scoped, tag = 'scratch operand']
  %s0 = inlined_call_operand.vmem [shape: f32[2,8,256], index: 0, kind: input, shape index: {}]
  %s1 = inlined_call_operand.vmem [shape: f32[4,32,8], index: 1, kind: input, shape index: {}]
  %s2 = inlined_call_operand.hbm [shape: u32[2,2,8,256], index: 2, kind: output, shape index: {}]
  %s3 = sld [smem:[#allocation0]]
  $region41: #{tpu_custom_call.1} parent=0
    _
  %s5 = ssub.s32 1, %s3
  %s6 = scalar_select 0, %s5, %s3
  $region1: #{tpu_custom_call.1} parent=0
    #allocation3 [shape = 'u8[32768]{0}', space=vmem, size = 0x8000, scoped, tag = 'output window, operand 0']
    #allocation4 [shape = 's32[2]{0}', space=sflag, size = 0x8, scoped, tag = 'scoped memory for tpu_custom_call.1']
    %7 = vsyncpa [#allocation4], 0
    %s8 = scalar_lea.sflag [#allocation4], 1
    %9 = vsyncpa %s8, 0
    loop: start=0, step=1, limit=4
    $region2: #{tpu_custom_call.1} parent=1 // loop_pre_header
      _
    $region3: #{tpu_custom_call.1} parent=1 // loop_header
      %s11 = sphi 0, %s15
      %p12 = scmp.ge.s32.totalorder %s11, 4
      %s18 = sphi 0, %s30
      %s19 = sphi 0, %s26
      %s20 = sphi 0, %s18
      %s21 = sphi 0, %s19
      %s22 = sphi 0, %s20
      %s23 = sphi 0, %s21
      %s33 = sphi 0, %s35
      %s36 = sphi 0, %s33
      %s37 = sphi 0, %s36
      %s53 = sphi 0, %s37
      %s59 = sphi 0, %s61
      %s62 = sphi 0, %s59
      %s63 = sphi 0, %s62
      %s79 = sphi 0, %s63
      %s87 = sphi 0, %s89
      %s90 = sphi 0, %s87
      %s91 = sphi 0, %s90
      %s107 = sphi 0, %s91
    $region4: #{tpu_custom_call.1} parent=1 // loop_header_branch
      %14 = sbr.rel (%p12) target = $region8
    $region5: #{tpu_custom_call.1} parent=1 // loop_body
      %s16 = ssub.s32 %s11, 1
      %s17 = ssub.s32 %s11, 2
      %s24 = sadd.s32 1, %s19
      %p25 = scmp.ge.s32.totalorder %s24, 1
      %s26 = scalar_select %p25, 0, %s24
      %s27 = sadd.s32 1, %s18
      %s28 = scalar_select %p25, %s27, %s18
      %p29 = scmp.ge.s32.totalorder %s28, 2
      %s30 = scalar_select %p29, 0, %s28
      %s31 = ssub.s32 %s18, %s30
      %p32 = scmp.eq.s32.totalorder %s31, 0
      %s34 = sadd.s32 %s33, 1
      %s35 = scalar_select %p32, %s33, %s34
      %p38 = pneg %p32
      %p39 = scmp.eq.s32.totalorder %s11, 1
      %p40 = por %p38, %p39
      %p41 = scmp.ne.s32.totalorder %s33, %s36
      %p42 = scmp.eq.s32.totalorder %s11, 0
      %p43 = por %p41, %p42
      %p44 = scmp.ne.s32.totalorder %s33, %s36
      %p45 = scmp.eq.s32.totalorder %s16, 1
      %p46 = por %p44, %p45
      %p47 = scmp.ne.s32.totalorder %s36, %s37
      %p48 = scmp.eq.s32.totalorder %s16, 0
      %p49 = por %p47, %p48
      %p50 = scmp.ne.s32.totalorder %s36, %s37
      %p51 = scmp.eq.s32.totalorder %s17, 1
      %p52 = por %p50, %p51
      %p54 = scmp.ne.s32.totalorder %s37, %s53
      %p55 = scmp.eq.s32.totalorder %s17, 0
      %p56 = por %p54, %p55
      %s57 = ssub.s32 %s19, %s26
      %p58 = scmp.eq.s32.totalorder %s57, 0
      %s60 = sadd.s32 %s59, 1
      %s61 = scalar_select %p58, %s59, %s60
      %p64 = pneg %p58
      %p65 = scmp.eq.s32.totalorder %s11, 1
      %p66 = por %p64, %p65
      %p67 = scmp.ne.s32.totalorder %s59, %s62
      %p68 = scmp.eq.s32.totalorder %s11, 0
      %p69 = por %p67, %p68
      %p70 = scmp.ne.s32.totalorder %s59, %s62
      %p71 = scmp.eq.s32.totalorder %s16, 1
      %p72 = por %p70, %p71
      %p73 = scmp.ne.s32.totalorder %s62, %s63
      %p74 = scmp.eq.s32.totalorder %s16, 0
      %p75 = por %p73, %p74
      %p76 = scmp.ne.s32.totalorder %s62, %s63
      %p77 = scmp.eq.s32.totalorder %s17, 1
      %p78 = por %p76, %p77
      %p80 = scmp.ne.s32.totalorder %s63, %s79
      %p81 = scmp.eq.s32.totalorder %s17, 0
      %p82 = por %p80, %p81
      %s83 = ssub.s32 %s18, %s30
      %s84 = ssub.s32 %s19, %s26
      %s85 = sor.u32 %s83, %s84
      %p86 = scmp.eq.s32.totalorder %s85, 0
      %s88 = sadd.s32 %s87, 1
      %s89 = scalar_select %p86, %s87, %s88
      %p92 = pneg %p86
      %p93 = scmp.eq.s32.totalorder %s11, 1
      %p94 = por %p92, %p93
      %p95 = scmp.ne.s32.totalorder %s87, %s90
      %p96 = scmp.eq.s32.totalorder %s11, 0
      %p97 = por %p95, %p96
      %p98 = scmp.ne.s32.totalorder %s87, %s90
      %p99 = scmp.eq.s32.totalorder %s16, 1
      %p100 = por %p98, %p99
      %p101 = scmp.ne.s32.totalorder %s90, %s91
      %p102 = scmp.eq.s32.totalorder %s16, 0
      %p103 = por %p101, %p102
      %p104 = scmp.ne.s32.totalorder %s90, %s91
      %p105 = scmp.eq.s32.totalorder %s17, 1
      %p106 = por %p104, %p105
      %p108 = scmp.ne.s32.totalorder %s91, %s107
      %p109 = scmp.eq.s32.totalorder %s17, 0
      %p110 = por %p108, %p109
      %p111 = scmp.le.s32.totalorder 1, %s11
      %p112 = scmp.lt.s32.totalorder %s11, 3
      %p113 = pnand %p111, %p112
      %p114 = pneg %p113
      // Predicated region
      $region9: #{tpu_custom_call.1} parent=5 // pred_check
        _
      $region10: #{tpu_custom_call.1} parent=5 // pred_check_branch
        %116 = sbr.rel (%p113) target = $region12
      $region11: #{tpu_custom_call.1} parent=5 // pred_region
        %s117 = ssub.s32 %s11, 1
        // Predicated region
        $region13: #{tpu_custom_call.1} parent=11 // pred_check
          %p118 = pneg %p75
        $region14: #{tpu_custom_call.1} parent=11 // pred_check_branch
          %120 = sbr.rel (%p118) target = $region16
        $region15: #{tpu_custom_call.1} parent=11 // pred_region
          %s121 = smul.u32 4, %s21
          %p122 = scmp.lt.s32.totalorder %s121, 3
          %s123 = scalar_select %p122, %s121, 3
          %s124 = smul.addr %s123, 8
          %s125 = scalar_lea.vmem %s1, %s124
          %s126 = smul.u32 4, %s21
        $region16: #{tpu_custom_call.1} parent=11 // pred_fallthru
          _
      $region12: #{tpu_custom_call.1} parent=5 // pred_fallthru
        _
      %p127 = scmp.lt.s32.totalorder %s11, 2
      // Predicated region
      $region17: #{tpu_custom_call.1} parent=5 // pred_check
        %p128 = pneg %p127
      $region18: #{tpu_custom_call.1} parent=5 // pred_check_branch
        %130 = sbr.rel (%p128) target = $region20
      $region19: #{tpu_custom_call.1} parent=5 // pred_region
        // Predicated region
        $region21: #{tpu_custom_call.1} parent=19 // pred_check
          %p131 = pneg %p43
        $region22: #{tpu_custom_call.1} parent=19 // pred_check_branch
          %133 = sbr.rel (%p131) target = $region24
        $region23: #{tpu_custom_call.1} parent=19 // pred_region
          %p134 = scmp.lt.s32.totalorder %s18, 1
          %s135 = scalar_select %p134, %s18, 1
          %s136 = smul.addr %s135, 2
          %s137 = smul.addr %s136, 8
          %s138 = scalar_lea.vmem %s0, %s137
        $region24: #{tpu_custom_call.1} parent=19 // pred_fallthru
          _
      $region20: #{tpu_custom_call.1} parent=5 // pred_fallthru
        _
      %p139 = scmp.le.s32.totalorder 1, %s11
      %p140 = scmp.lt.s32.totalorder %s11, 3
      %p141 = pnand %p139, %p140
      %p142 = pneg %p141
      // Predicated region
      $region25: #{tpu_custom_call.1} parent=5 // pred_check
        _
      $region26: #{tpu_custom_call.1} parent=5 // pred_check_branch
        %144 = sbr.rel (%p141) target = $region28
      $region27: #{tpu_custom_call.1} parent=5 // pred_region
        %s145 = ssub.s32 %s11, 1
        %p146 = scmp.lt.s32.totalorder %s20, 1
        %s147 = scalar_select %p146, %s20, 1
        %s148 = smul.addr %s147, 2
        %s149 = smul.addr %s148, 8
        %s150 = scalar_lea.vmem %s0, %s149
        %p151 = pneg %p49
        %p152 = pneg %p46
        %s153 = smul.u32 4, %s21
        %p154 = scmp.lt.s32.totalorder %s153, 3
        %s155 = scalar_select %p154, %s153, 3
        %s156 = smul.addr %s155, 8
        %s157 = scalar_lea.vmem %s1, %s156
        %p158 = pneg %p75
        %p159 = pneg %p72
        %p160 = pneg %p103
        %p161 = pneg %p100
        %s162 = sand.u32 %s90, 1
        %s163 = scalar_lea.sflag [#allocation4], %s162
        %s164 = sand.u32 %s90, 1
        %s165 = smul.addr %s164, 32
        %s166 = scalar_lea.vmem [#allocation3], %s165
        %p167 = scmp.lt.s32.totalorder %s20, 1
        %s168 = scalar_select %p167, %s20, 1
        %s169 = smul.addr %s168, 2
        %s170 = smul.addr %s169, 8
        %s171 = scalar_lea.vmem %s0, %s170
        %s172 = smul.u32 4, %s21
        %p173 = scmp.lt.s32.totalorder %s172, 3
        %s174 = scalar_select %p173, %s172, 3
        %s175 = smul.addr %s174, 8
        %s176 = scalar_lea.vmem %s1, %s175
        %s177 = smul.u32 4, %s21
        %v178 = vlaneseq
        %v179 = vand.u32 %v178, 127
        %v180 = vadd.s32 %v179, 128
        %v181 = vand.u32 %v179, 15
        %v182 = vand.u32 %v180, 15
        %vm183 = vcmp.ge.s32.totalorder %v179, 16
        %vm184 = vcmp.ge.s32.totalorder %v180, 16
        %vm185 = vcmp.lt.s32.totalorder %v179, 240
        %vm186 = vcmp.lt.s32.totalorder %v180, 240
        %vm187 = vcmp.ge.s32.totalorder %v181, 1
        %vm188 = vcmp.ge.s32.totalorder %v182, 1
        %vm189 = vcmp.le.s32.totalorder %v181, 14
        %vm190 = vcmp.le.s32.totalorder %v182, 14
        %vm191 = vmand %vm183, %vm187
        %vm192 = vmand %vm184, %vm188
        %vm193 = vmand %vm183, %vm189
        %vm194 = vmand %vm184, %vm190
        %vm195 = vmand %vm185, %vm187
        %vm196 = vmand %vm186, %vm188
        %vm197 = vmand %vm185, %vm189
        %vm198 = vmand %vm186, %vm190
        %v199 = vld [vmem:[%s171] sm:$0xff]
        %v200 = vld [vmem:[%s171 + $0x8] sm:$0xff]
        %v201 = vld [vmem:[%s176] sm:$0xff]
        %v202 = vld [vmem:[%s176 + $0x8] sm:$0xff]
        %v203 = vld [vmem:[%s176 + $0x10] sm:$0xff]
        %v204 = vld [vmem:[%s176 + $0x18] sm:$0xff]
        %vm205 = vcmask 64512
        %v207 = vsel %vm205, %v201, 0
        %v210 = vsel %vm205, %v202, 0
        %v213 = vsel %vm205, %v203, 0
        %v216 = vsel %vm205, %v204, 0
        %218 = vmatpush.msra.mxu0 0.0
        %219 = vmatpush.msra.mxu0 0.0
        %220 = vmatpush.msra.mxu0 0.0
        %221 = vmatpush.msra.mxu0 0.0
        %222 = vmatpush.msra.mxu0 0.0
        %223 = vmatpush.msra.mxu0 0.0
        %224 = vmatpush.msra.mxu0 0.0
        %225 = vmatpush.msra.mxu0 0.0
        %226 = vmatpush.msra.mxu0 0.0
        %227 = vmatpush.msra.mxu0 0.0
        %228 = vmatpush.msra.mxu0 0.0
        %229 = vmatpush.msra.mxu0 0.0
        %230 = vmatpush.msra.mxu0 0.0
        %231 = vmatpush.msra.mxu0 0.0
        %232 = vmatpush.msra.mxu0 0.0
        %233 = vmatpush.msra.mxu0 %v199
        %234 = vmatmul.f32.gmra.mxu0 %v207
        %v235 = vpop.f32.mrf.mxu0
        %v236 = vadd.f32 0.0, %v235
        %237 = vmatmul.f32.gmra.mxu0 %v210
        %v238 = vpop.f32.mrf.mxu0
        %v239 = vadd.f32 0.0, %v238
        %240 = vmatmul.f32.gmra.mxu0 %v213
        %v241 = vpop.f32.mrf.mxu0
        %v242 = vadd.f32 0.0, %v241
        %243 = vmatmul.f32.gmra.mxu0 %v216
        %v244 = vpop.f32.mrf.mxu0
        %v245 = vadd.f32 0.0, %v244
        %246 = vdwg.mxu0
        %247 = vmatpush.msra.mxu0 0.0
        %248 = vmatpush.msra.mxu0 0.0
        %249 = vmatpush.msra.mxu0 0.0
        %250 = vmatpush.msra.mxu0 0.0
        %251 = vmatpush.msra.mxu0 0.0
        %252 = vmatpush.msra.mxu0 0.0
        %253 = vmatpush.msra.mxu0 0.0
        %254 = vmatpush.msra.mxu0 0.0
        %255 = vmatpush.msra.mxu0 0.0
        %256 = vmatpush.msra.mxu0 0.0
        %257 = vmatpush.msra.mxu0 0.0
        %258 = vmatpush.msra.mxu0 0.0
        %259 = vmatpush.msra.mxu0 0.0
        %260 = vmatpush.msra.mxu0 0.0
        %261 = vmatpush.msra.mxu0 0.0
        %262 = vmatpush.msra.mxu0 %v200
        %263 = vmatmul.f32.gmra.mxu0 %v207
        %v264 = vpop.f32.mrf.mxu0
        %v265 = vadd.f32 0.0, %v264
        %266 = vmatmul.f32.gmra.mxu0 %v210
        %v267 = vpop.f32.mrf.mxu0
        %v268 = vadd.f32 0.0, %v267
        %269 = vmatmul.f32.gmra.mxu0 %v213
        %v270 = vpop.f32.mrf.mxu0
        %v271 = vadd.f32 0.0, %v270
        %272 = vmatmul.f32.gmra.mxu0 %v216
        %v273 = vpop.f32.mrf.mxu0
        %v274 = vadd.f32 0.0, %v273
        %275 = vdwg.mxu0
        %276 = vrot.lane.b32.xlu0 %v239, 1
        %v277 = vpop.permute.xlu0 %276
        %278 = vrot.lane.b32.xlu0 %v268, 1
        %v279 = vpop.permute.xlu0 %278
        %vm280 = vcmp.lt.s32.totalorder %v179, 1
        %v281 = vsel %vm280, %v277, %v279
        %v282 = vsel %vm280, %v279, %v277
        %v283 = vsel %vm187, 1, 0
        %v284 = vsel %vm188, 1, 0
        %vm285 = vcmp.eq.s32.totalorder %v283, 1
        %vm286 = vcmp.eq.s32.totalorder %v284, 1
        %v287 = vsel %vm285, %v282, 0.0
        %v288 = vsel %vm286, %v281, 0.0
        %v289 = vadd.f32 %v236, %v287
        %v290 = vadd.f32 %v265, %v288
        %291 = vrot.lane.b32.xlu0 %v242, 16
        %v292 = vpop.permute.xlu0 %291
        %293 = vrot.lane.b32.xlu0 %v271, 16
        %v294 = vpop.permute.xlu0 %293
        %vm295 = vcmp.lt.s32.totalorder %v179, 16
        %v296 = vsel %vm295, %v292, %v294
        %v297 = vsel %vm295, %v294, %v292
        %v298 = vsel %vm183, 1, 0
        %v299 = vsel %vm184, 1, 0
        %vm300 = vcmp.eq.s32.totalorder %v298, 1
        %vm301 = vcmp.eq.s32.totalorder %v299, 1
        %v302 = vsel %vm300, %v297, 0.0
        %v303 = vsel %vm301, %v296, 0.0
        %v304 = vadd.f32 %v289, %v302
        %v305 = vadd.f32 %v290, %v303
        %306 = vrot.lane.b32.xlu0 %v245, 17
        %v307 = vpop.permute.xlu0 %306
        %308 = vrot.lane.b32.xlu0 %v274, 17
        %v309 = vpop.permute.xlu0 %308
        %vm310 = vcmp.lt.s32.totalorder %v179, 17
        %v311 = vsel %vm310, %v307, %v309
        %v312 = vsel %vm310, %v309, %v307
        %v313 = vsel %vm191, 1, 0
        %v314 = vsel %vm192, 1, 0
        %vm315 = vcmp.eq.s32.totalorder %v313, 1
        %vm316 = vcmp.eq.s32.totalorder %v314, 1
        %v317 = vsel %vm315, %v312, 0.0
        %v318 = vsel %vm316, %v311, 0.0
        %v319 = vadd.f32 %v304, %v317
        %v320 = vadd.f32 %v305, %v318
        %321 = vst [vmem:[#allocation2] sm:$0xff] %v319
        %322 = vst [vmem:[#allocation2 + $0x8] sm:$0xff] %v320
        %v323 = vadd.f32 %v319, %v320
        %324 = vadd.xlane.f32.xlu0 %v323
        %v325 = vpop.xlane.xlu0 %324
        %v326 = vadd.f32 %v325, 0.0
        %s327 = scalar_lea.vmem %s176, 32
        %v328 = vld [vmem:[%s327] sm:$0xff]
        %v329 = vld [vmem:[%s327 + $0x8] sm:$0xff]
        %v330 = vld [vmem:[%s327 + $0x10] sm:$0xff]
        %v331 = vld [vmem:[%s327 + $0x18] sm:$0xff]
        %v333 = vsel %vm205, %v328, 0
        %v336 = vsel %vm205, %v329, 0
        %v339 = vsel %vm205, %v330, 0
        %v342 = vsel %vm205, %v331, 0
        %344 = vmatpush.msra.mxu0 0.0
        %345 = vmatpush.msra.mxu0 0.0
        %346 = vmatpush.msra.mxu0 0.0
        %347 = vmatpush.msra.mxu0 0.0
        %348 = vmatpush.msra.mxu0 0.0
        %349 = vmatpush.msra.mxu0 0.0
        %350 = vmatpush.msra.mxu0 0.0
        %351 = vmatpush.msra.mxu0 0.0
        %352 = vmatpush.msra.mxu0 0.0
        %353 = vmatpush.msra.mxu0 0.0
        %354 = vmatpush.msra.mxu0 0.0
        %355 = vmatpush.msra.mxu0 0.0
        %356 = vmatpush.msra.mxu0 0.0
        %357 = vmatpush.msra.mxu0 0.0
        %358 = vmatpush.msra.mxu0 0.0
        %359 = vmatpush.msra.mxu0 %v199
        %360 = vmatmul.f32.gmra.mxu0 %v333
        %v361 = vpop.f32.mrf.mxu0
        %v362 = vadd.f32 0.0, %v361
        %363 = vmatmul.f32.gmra.mxu0 %v336
        %v364 = vpop.f32.mrf.mxu0
        %v365 = vadd.f32 0.0, %v364
        %366 = vmatmul.f32.gmra.mxu0 %v339
        %v367 = vpop.f32.mrf.mxu0
        %v368 = vadd.f32 0.0, %v367
        %369 = vmatmul.f32.gmra.mxu0 %v342
        %v370 = vpop.f32.mrf.mxu0
        %v371 = vadd.f32 0.0, %v370
        %372 = vdwg.mxu0
        %373 = vmatpush.msra.mxu0 0.0
        %374 = vmatpush.msra.mxu0 0.0
        %375 = vmatpush.msra.mxu0 0.0
        %376 = vmatpush.msra.mxu0 0.0
        %377 = vmatpush.msra.mxu0 0.0
        %378 = vmatpush.msra.mxu0 0.0
        %379 = vmatpush.msra.mxu0 0.0
        %380 = vmatpush.msra.mxu0 0.0
        %381 = vmatpush.msra.mxu0 0.0
        %382 = vmatpush.msra.mxu0 0.0
        %383 = vmatpush.msra.mxu0 0.0
        %384 = vmatpush.msra.mxu0 0.0
        %385 = vmatpush.msra.mxu0 0.0
        %386 = vmatpush.msra.mxu0 0.0
        %387 = vmatpush.msra.mxu0 0.0
        %388 = vmatpush.msra.mxu0 %v200
        %389 = vmatmul.f32.gmra.mxu0 %v333
        %v390 = vpop.f32.mrf.mxu0
        %v391 = vadd.f32 0.0, %v390
        %392 = vmatmul.f32.gmra.mxu0 %v336
        %v393 = vpop.f32.mrf.mxu0
        %v394 = vadd.f32 0.0, %v393
        %395 = vmatmul.f32.gmra.mxu0 %v339
        %v396 = vpop.f32.mrf.mxu0
        %v397 = vadd.f32 0.0, %v396
        %398 = vmatmul.f32.gmra.mxu0 %v342
        %v399 = vpop.f32.mrf.mxu0
        %v400 = vadd.f32 0.0, %v399
        %401 = vdwg.mxu0
        %402 = vrot.lane.b32.xlu0 %v365, 127
        %v403 = vpop.permute.xlu0 %402
        %404 = vrot.lane.b32.xlu0 %v394, 127
        %v405 = vpop.permute.xlu0 %404
        %vm406 = vcmp.lt.s32.totalorder %v179, 127
        %v407 = vsel %vm406, %v403, %v405
        %v408 = vsel %vm406, %v405, %v403
        %v409 = vsel %vm189, 1, 0
        %v410 = vsel %vm190, 1, 0
        %vm411 = vcmp.eq.s32.totalorder %v409, 1
        %vm412 = vcmp.eq.s32.totalorder %v410, 1
        %v413 = vsel %vm411, %v407, 0.0
        %v414 = vsel %vm412, %v408, 0.0
        %v415 = vadd.f32 %v362, %v413
        %v416 = vadd.f32 %v391, %v414
        %417 = vrot.lane.b32.xlu0 %v368, 16
        %v418 = vpop.permute.xlu0 %417
        %419 = vrot.lane.b32.xlu0 %v397, 16
        %v420 = vpop.permute.xlu0 %419
        %v421 = vsel %vm295, %v418, %v420
        %v422 = vsel %vm295, %v420, %v418
        %v423 = vsel %vm300, %v422, 0.0
        %v424 = vsel %vm301, %v421, 0.0
        %v425 = vadd.f32 %v415, %v423
        %v426 = vadd.f32 %v416, %v424
        %427 = vrot.lane.b32.xlu0 %v371, 15
        %v428 = vpop.permute.xlu0 %427
        %429 = vrot.lane.b32.xlu0 %v400, 15
        %v430 = vpop.permute.xlu0 %429
        %vm431 = vcmp.lt.s32.totalorder %v179, 15
        %v432 = vsel %vm431, %v428, %v430
        %v433 = vsel %vm431, %v430, %v428
        %v434 = vsel %vm193, 1, 0
        %v435 = vsel %vm194, 1, 0
        %vm436 = vcmp.eq.s32.totalorder %v434, 1
        %vm437 = vcmp.eq.s32.totalorder %v435, 1
        %v438 = vsel %vm436, %v433, 0.0
        %v439 = vsel %vm437, %v432, 0.0
        %v440 = vadd.f32 %v425, %v438
        %v441 = vadd.f32 %v426, %v439
        %s442 = scalar_lea.vmem [#allocation2], 16
        %443 = vst [vmem:[%s442] sm:$0xff] %v440
        %444 = vst [vmem:[%s442 + $0x8] sm:$0xff] %v441
        %v445 = vadd.f32 %v440, %v441
        %446 = vadd.xlane.f32.xlu0 %v445
        %v447 = vpop.xlane.xlu0 %446
        %v448 = vadd.f32 %v326, %v447
        %s449 = scalar_lea.vmem %s176, 64
        %v450 = vld [vmem:[%s449] sm:$0xff]
        %v451 = vld [vmem:[%s449 + $0x8] sm:$0xff]
        %v452 = vld [vmem:[%s449 + $0x10] sm:$0xff]
        %v453 = vld [vmem:[%s449 + $0x18] sm:$0xff]
        %v455 = vsel %vm205, %v450, 0
        %v458 = vsel %vm205, %v451, 0
        %v461 = vsel %vm205, %v452, 0
        %v464 = vsel %vm205, %v453, 0
        %466 = vmatpush.msra.mxu0 0.0
        %467 = vmatpush.msra.mxu0 0.0
        %468 = vmatpush.msra.mxu0 0.0
        %469 = vmatpush.msra.mxu0 0.0
        %470 = vmatpush.msra.mxu0 0.0
        %471 = vmatpush.msra.mxu0 0.0
        %472 = vmatpush.msra.mxu0 0.0
        %473 = vmatpush.msra.mxu0 0.0
        %474 = vmatpush.msra.mxu0 0.0
        %475 = vmatpush.msra.mxu0 0.0
        %476 = vmatpush.msra.mxu0 0.0
        %477 = vmatpush.msra.mxu0 0.0
        %478 = vmatpush.msra.mxu0 0.0
        %479 = vmatpush.msra.mxu0 0.0
        %480 = vmatpush.msra.mxu0 0.0
        %481 = vmatpush.msra.mxu0 %v199
        %482 = vmatmul.f32.gmra.mxu0 %v455
        %v483 = vpop.f32.mrf.mxu0
        %v484 = vadd.f32 0.0, %v483
        %485 = vmatmul.f32.gmra.mxu0 %v458
        %v486 = vpop.f32.mrf.mxu0
        %v487 = vadd.f32 0.0, %v486
        %488 = vmatmul.f32.gmra.mxu0 %v461
        %v489 = vpop.f32.mrf.mxu0
        %v490 = vadd.f32 0.0, %v489
        %491 = vmatmul.f32.gmra.mxu0 %v464
        %v492 = vpop.f32.mrf.mxu0
        %v493 = vadd.f32 0.0, %v492
        %494 = vdwg.mxu0
        %495 = vmatpush.msra.mxu0 0.0
        %496 = vmatpush.msra.mxu0 0.0
        %497 = vmatpush.msra.mxu0 0.0
        %498 = vmatpush.msra.mxu0 0.0
        %499 = vmatpush.msra.mxu0 0.0
        %500 = vmatpush.msra.mxu0 0.0
        %501 = vmatpush.msra.mxu0 0.0
        %502 = vmatpush.msra.mxu0 0.0
        %503 = vmatpush.msra.mxu0 0.0
        %504 = vmatpush.msra.mxu0 0.0
        %505 = vmatpush.msra.mxu0 0.0
        %506 = vmatpush.msra.mxu0 0.0
        %507 = vmatpush.msra.mxu0 0.0
        %508 = vmatpush.msra.mxu0 0.0
        %509 = vmatpush.msra.mxu0 0.0
        %510 = vmatpush.msra.mxu0 %v200
        %511 = vmatmul.f32.gmra.mxu0 %v455
        %v512 = vpop.f32.mrf.mxu0
        %v513 = vadd.f32 0.0, %v512
        %514 = vmatmul.f32.gmra.mxu0 %v458
        %v515 = vpop.f32.mrf.mxu0
        %v516 = vadd.f32 0.0, %v515
        %517 = vmatmul.f32.gmra.mxu0 %v461
        %v518 = vpop.f32.mrf.mxu0
        %v519 = vadd.f32 0.0, %v518
        %520 = vmatmul.f32.gmra.mxu0 %v464
        %v521 = vpop.f32.mrf.mxu0
        %v522 = vadd.f32 0.0, %v521
        %523 = vdwg.mxu0
        %524 = vrot.lane.b32.xlu0 %v487, 1
        %v525 = vpop.permute.xlu0 %524
        %526 = vrot.lane.b32.xlu0 %v516, 1
        %v527 = vpop.permute.xlu0 %526
        %v528 = vsel %vm280, %v525, %v527
        %v529 = vsel %vm280, %v527, %v525
        %v530 = vsel %vm285, %v529, 0.0
        %v531 = vsel %vm286, %v528, 0.0
        %v532 = vadd.f32 %v484, %v530
        %v533 = vadd.f32 %v513, %v531
        %534 = vrot.lane.b32.xlu0 %v490, 112
        %v535 = vpop.permute.xlu0 %534
        %536 = vrot.lane.b32.xlu0 %v519, 112
        %v537 = vpop.permute.xlu0 %536
        %vm538 = vcmp.lt.s32.totalorder %v179, 112
        %v539 = vsel %vm538, %v535, %v537
        %v540 = vsel %vm538, %v537, %v535
        %v541 = vsel %vm185, 1, 0
        %v542 = vsel %vm186, 1, 0
        %vm543 = vcmp.eq.s32.totalorder %v541, 1
        %vm544 = vcmp.eq.s32.totalorder %v542, 1
        %v545 = vsel %vm543, %v539, 0.0
        %v546 = vsel %vm544, %v540, 0.0
        %v547 = vadd.f32 %v532, %v545
        %v548 = vadd.f32 %v533, %v546
        %549 = vrot.lane.b32.xlu0 %v493, 113
        %v550 = vpop.permute.xlu0 %549
        %551 = vrot.lane.b32.xlu0 %v522, 113
        %v552 = vpop.permute.xlu0 %551
        %vm553 = vcmp.lt.s32.totalorder %v179, 113
        %v554 = vsel %vm553, %v550, %v552
        %v555 = vsel %vm553, %v552, %v550
        %v556 = vsel %vm195, 1, 0
        %v557 = vsel %vm196, 1, 0
        %vm558 = vcmp.eq.s32.totalorder %v556, 1
        %vm559 = vcmp.eq.s32.totalorder %v557, 1
        %v560 = vsel %vm558, %v554, 0.0
        %v561 = vsel %vm559, %v555, 0.0
        %v562 = vadd.f32 %v547, %v560
        %v563 = vadd.f32 %v548, %v561
        %s564 = scalar_lea.vmem [#allocation2], 32
        %565 = vst [vmem:[%s564] sm:$0xff] %v562
        %566 = vst [vmem:[%s564 + $0x8] sm:$0xff] %v563
        %v567 = vadd.f32 %v562, %v563
        %568 = vadd.xlane.f32.xlu0 %v567
        %v569 = vpop.xlane.xlu0 %568
        %v570 = vadd.f32 %v448, %v569
        %s571 = scalar_lea.vmem %s176, 96
        %v572 = vld [vmem:[%s571] sm:$0xff]
        %v573 = vld [vmem:[%s571 + $0x8] sm:$0xff]
        %v574 = vld [vmem:[%s571 + $0x10] sm:$0xff]
        %v575 = vld [vmem:[%s571 + $0x18] sm:$0xff]
        %v577 = vsel %vm205, %v572, 0
        %v580 = vsel %vm205, %v573, 0
        %v583 = vsel %vm205, %v574, 0
        %v586 = vsel %vm205, %v575, 0
        %588 = vmatpush.msra.mxu0 0.0
        %589 = vmatpush.msra.mxu0 0.0
        %590 = vmatpush.msra.mxu0 0.0
        %591 = vmatpush.msra.mxu0 0.0
        %592 = vmatpush.msra.mxu0 0.0
        %593 = vmatpush.msra.mxu0 0.0
        %594 = vmatpush.msra.mxu0 0.0
        %595 = vmatpush.msra.mxu0 0.0
        %596 = vmatpush.msra.mxu0 0.0
        %597 = vmatpush.msra.mxu0 0.0
        %598 = vmatpush.msra.mxu0 0.0
        %599 = vmatpush.msra.mxu0 0.0
        %600 = vmatpush.msra.mxu0 0.0
        %601 = vmatpush.msra.mxu0 0.0
        %602 = vmatpush.msra.mxu0 0.0
        %603 = vmatpush.msra.mxu0 %v199
        %604 = vmatmul.f32.gmra.mxu0 %v577
        %v605 = vpop.f32.mrf.mxu0
        %v606 = vadd.f32 0.0, %v605
        %607 = vmatmul.f32.gmra.mxu0 %v580
        %v608 = vpop.f32.mrf.mxu0
        %v609 = vadd.f32 0.0, %v608
        %610 = vmatmul.f32.gmra.mxu0 %v583
        %v611 = vpop.f32.mrf.mxu0
        %v612 = vadd.f32 0.0, %v611
        %613 = vmatmul.f32.gmra.mxu0 %v586
        %v614 = vpop.f32.mrf.mxu0
        %v615 = vadd.f32 0.0, %v614
        %616 = vdwg.mxu0
        %617 = vmatpush.msra.mxu0 0.0
        %618 = vmatpush.msra.mxu0 0.0
        %619 = vmatpush.msra.mxu0 0.0
        %620 = vmatpush.msra.mxu0 0.0
        %621 = vmatpush.msra.mxu0 0.0
        %622 = vmatpush.msra.mxu0 0.0
        %623 = vmatpush.msra.mxu0 0.0
        %624 = vmatpush.msra.mxu0 0.0
        %625 = vmatpush.msra.mxu0 0.0
        %626 = vmatpush.msra.mxu0 0.0
        %627 = vmatpush.msra.mxu0 0.0
        %628 = vmatpush.msra.mxu0 0.0
        %629 = vmatpush.msra.mxu0 0.0
        %630 = vmatpush.msra.mxu0 0.0
        %631 = vmatpush.msra.mxu0 0.0
        %632 = vmatpush.msra.mxu0 %v200
        %633 = vmatmul.f32.gmra.mxu0 %v577
        %v634 = vpop.f32.mrf.mxu0
        %v635 = vadd.f32 0.0, %v634
        %636 = vmatmul.f32.gmra.mxu0 %v580
        %v637 = vpop.f32.mrf.mxu0
        %v638 = vadd.f32 0.0, %v637
        %639 = vmatmul.f32.gmra.mxu0 %v583
        %v640 = vpop.f32.mrf.mxu0
        %v641 = vadd.f32 0.0, %v640
        %642 = vmatmul.f32.gmra.mxu0 %v586
        %v643 = vpop.f32.mrf.mxu0
        %v644 = vadd.f32 0.0, %v643
        %645 = vdwg.mxu0
        %646 = vrot.lane.b32.xlu0 %v609, 127
        %v647 = vpop.permute.xlu0 %646
        %648 = vrot.lane.b32.xlu0 %v638, 127
        %v649 = vpop.permute.xlu0 %648
        %v650 = vsel %vm406, %v647, %v649
        %v651 = vsel %vm406, %v649, %v647
        %v652 = vsel %vm411, %v650, 0.0
        %v653 = vsel %vm412, %v651, 0.0
        %v654 = vadd.f32 %v606, %v652
        %v655 = vadd.f32 %v635, %v653
        %656 = vrot.lane.b32.xlu0 %v612, 112
        %v657 = vpop.permute.xlu0 %656
        %658 = vrot.lane.b32.xlu0 %v641, 112
        %v659 = vpop.permute.xlu0 %658
        %v660 = vsel %vm538, %v657, %v659
        %v661 = vsel %vm538, %v659, %v657
        %v662 = vsel %vm543, %v660, 0.0
        %v663 = vsel %vm544, %v661, 0.0
        %v664 = vadd.f32 %v654, %v662
        %v665 = vadd.f32 %v655, %v663
        %666 = vrot.lane.b32.xlu0 %v615, 111
        %v667 = vpop.permute.xlu0 %666
        %668 = vrot.lane.b32.xlu0 %v644, 111
        %v669 = vpop.permute.xlu0 %668
        %vm670 = vcmp.lt.s32.totalorder %v179, 111
        %v671 = vsel %vm670, %v667, %v669
        %v672 = vsel %vm670, %v669, %v667
        %v673 = vsel %vm197, 1, 0
        %v674 = vsel %vm198, 1, 0
        %vm675 = vcmp.eq.s32.totalorder %v673, 1
        %vm676 = vcmp.eq.s32.totalorder %v674, 1
        %v677 = vsel %vm675, %v671, 0.0
        %v678 = vsel %vm676, %v672, 0.0
        %v679 = vadd.f32 %v664, %v677
        %v680 = vadd.f32 %v665, %v678
        %s681 = scalar_lea.vmem [#allocation2], 48
        %682 = vst [vmem:[%s681] sm:$0xff] %v679
        %683 = vst [vmem:[%s681 + $0x8] sm:$0xff] %v680
        %v684 = vadd.f32 %v679, %v680
        %685 = vadd.xlane.f32.xlu0 %v684
        %v686 = vpop.xlane.xlu0 %685
        %v687 = vadd.f32 %v570, %v686
        %v688 = vmul.f32 %v687, 0.0009765625
        %v689 = vld [vmem:[#allocation2] sm:$0xff]
        %v690 = vld [vmem:[#allocation2 + $0x8] sm:$0xff]
        %v691 = vsub.f32 %v689, %v688
        %v692 = vsub.f32 %v690, %v688
        %v693 = vmul.f32 %v691, %v691
        %v694 = vmul.f32 %v692, %v692
        %v695 = vadd.f32 %v693, %v694
        %696 = vadd.xlane.f32.xlu0 %v695
        %v697 = vpop.xlane.xlu0 %696
        %v698 = vadd.f32 %v697, 0.0
        %v699 = vld [vmem:[%s442] sm:$0xff]
        %v700 = vld [vmem:[%s442 + $0x8] sm:$0xff]
        %v701 = vsub.f32 %v699, %v688
        %v702 = vsub.f32 %v700, %v688
        %v703 = vmul.f32 %v701, %v701
        %v704 = vmul.f32 %v702, %v702
        %v705 = vadd.f32 %v703, %v704
        %706 = vadd.xlane.f32.xlu0 %v705
        %v707 = vpop.xlane.xlu0 %706
        %v708 = vadd.f32 %v698, %v707
        %v709 = vld [vmem:[%s564] sm:$0xff]
        %v710 = vld [vmem:[%s564 + $0x8] sm:$0xff]
        %v711 = vsub.f32 %v709, %v688
        %v712 = vsub.f32 %v710, %v688
        %v713 = vmul.f32 %v711, %v711
        %v714 = vmul.f32 %v712, %v712
        %v715 = vadd.f32 %v713, %v714
        %716 = vadd.xlane.f32.xlu0 %v715
        %v717 = vpop.xlane.xlu0 %716
        %v718 = vadd.f32 %v708, %v717
        %v719 = vld [vmem:[%s681] sm:$0xff]
        %v720 = vld [vmem:[%s681 + $0x8] sm:$0xff]
        %v721 = vsub.f32 %v719, %v688
        %v722 = vsub.f32 %v720, %v688
        %v723 = vmul.f32 %v721, %v721
        %v724 = vmul.f32 %v722, %v722
        %v725 = vadd.f32 %v723, %v724
        %726 = vadd.xlane.f32.xlu0 %v725
        %v727 = vpop.xlane.xlu0 %726
        %v728 = vadd.f32 %v718, %v727
        %v729 = vmul.f32 %v728, 0.0009765625
        %v730 = vadd.f32 %v729, 1e-05
        %v731 = vrsqrt.pop %v730
        %v732 = vmul.f32 %v731, %v730
        %v733 = vmul.f32 %v732, %v731
        %v734 = vmul.f32 0.5, %v733
        %v735 = vsub.f32 1.5, %v734
        %v736 = vmul.f32 %v731, %v735
        %vm737 = vweird.f32 %v730
        %vm738 = vweird.f32 %v731
        %vm739 = vmor %vm737, %vm738
        %v740 = vsel %vm739, %v731, %v736
        %v741 = vmul.f32 %v691, %v740
        %v742 = vmul.f32 %v692, %v740
        %v743 = vmax.f32 %v741, 0.0
        %v744 = vmax.f32 %v742, 0.0
        %v745 = vmul.f32 %v701, %v740
        %v746 = vmul.f32 %v702, %v740
        %v747 = vmax.f32 %v745, 0.0
        %v748 = vmax.f32 %v746, 0.0
        %v751 = vadd.s32 %v743, 32767
        %v752 = vadd.s32 %v744, 32767
        %v753 = vshrl.u32 %v743, 16
        %v754 = vshrl.u32 %v744, 16
        %v755 = vand.u32 %v753, 1
        %v756 = vand.u32 %v754, 1
        %v757 = vadd.s32 %v751, %v755
        %v758 = vadd.s32 %v752, %v756
        %v759 = vshrl.u32 %v757, 16
        %v760 = vshrl.u32 %v758, 16
        %v763 = vadd.s32 %v747, 32767
        %v764 = vadd.s32 %v748, 32767
        %v765 = vshrl.u32 %v747, 16
        %v766 = vshrl.u32 %v748, 16
        %v767 = vand.u32 %v765, 1
        %v768 = vand.u32 %v766, 1
        %v769 = vadd.s32 %v763, %v767
        %v770 = vadd.s32 %v764, %v768
        %v771 = vshrl.u32 %v769, 16
        %v772 = vshrl.u32 %v770, 16
        %v773 = vshll.u32 %v771, 16
        %v774 = vshll.u32 %v772, 16
        %v775 = vor.u32 %v759, %v773
        %v776 = vor.u32 %v760, %v774
        %777 = vst [vmem:[%s166] sm:$0xff] %v775
        %778 = vst [vmem:[%s166 + $0x8] sm:$0xff] %v776
        %v779 = vld [vmem:[%s564] sm:$0xff]
        %v780 = vld [vmem:[%s564 + $0x8] sm:$0xff]
        %v781 = vsub.f32 %v779, %v688
        %v782 = vsub.f32 %v780, %v688
        %v783 = vmul.f32 %v781, %v740
        %v784 = vmul.f32 %v782, %v740
        %v785 = vmax.f32 %v783, 0.0
        %v786 = vmax.f32 %v784, 0.0
        %v787 = vld [vmem:[%s681] sm:$0xff]
        %v788 = vld [vmem:[%s681 + $0x8] sm:$0xff]
        %v789 = vsub.f32 %v787, %v688
        %v790 = vsub.f32 %v788, %v688
        %v791 = vmul.f32 %v789, %v740
        %v792 = vmul.f32 %v790, %v740
        %v793 = vmax.f32 %v791, 0.0
        %v794 = vmax.f32 %v792, 0.0
        %v797 = vadd.s32 %v785, 32767
        %v798 = vadd.s32 %v786, 32767
        %v799 = vshrl.u32 %v785, 16
        %v800 = vshrl.u32 %v786, 16
        %v801 = vand.u32 %v799, 1
        %v802 = vand.u32 %v800, 1
        %v803 = vadd.s32 %v797, %v801
        %v804 = vadd.s32 %v798, %v802
        %v805 = vshrl.u32 %v803, 16
        %v806 = vshrl.u32 %v804, 16
        %v809 = vadd.s32 %v793, 32767
        %v810 = vadd.s32 %v794, 32767
        %v811 = vshrl.u32 %v793, 16
        %v812 = vshrl.u32 %v794, 16
        %v813 = vand.u32 %v811, 1
        %v814 = vand.u32 %v812, 1
        %v815 = vadd.s32 %v809, %v813
        %v816 = vadd.s32 %v810, %v814
        %v817 = vshrl.u32 %v815, 16
        %v818 = vshrl.u32 %v816, 16
        %v819 = vshll.u32 %v817, 16
        %v820 = vshll.u32 %v818, 16
        %v821 = vor.u32 %v805, %v819
        %v822 = vor.u32 %v806, %v820
        %s823 = scalar_lea.vmem %s166, 16 [#allocation3]
        %824 = vst [vmem:[%s823] sm:$0xff] %v821
        %825 = vst [vmem:[%s823 + $0x8] sm:$0xff] %v822
        %s826 = sand.u32 %s90, 1
        %s827 = scalar_lea.sflag [#allocation4], %s826
        %s828 = sand.u32 %s90, 1
        %s829 = smul.addr %s828, 32
        %s830 = scalar_lea.vmem [#allocation3], %s829
        // Predicated region
        $region29: #{tpu_custom_call.1} parent=27 // pred_check
          %p831 = pneg %p100
        $region30: #{tpu_custom_call.1} parent=27 // pred_check_branch
          %833 = sbr.rel (%p831) target = $region32
        $region31: #{tpu_custom_call.1} parent=27 // pred_region
          %835 = vsyncadd %s827, 0
          %s836 = smul.addr %s21, 2
          %s837 = smul.addr %s20, 4
          %s838 = sadd.s32 %s836, %s837
          %s839 = smul.addr %s838, 8
          %s840 = scalar_lea.hbm %s2, %s839
          %s841 = sshll.u32 %s830, 4
          %s842 = int_to_ptr.vmem [resolvable:$true] %s841
          %s843 = sshll.u32 %s840, 4
          %s844 = int_to_ptr.hbm [resolvable:$true] %s843
          %849 = dma.vmem_to_hbm [thread:$0]  %s842, 512, %s844, %s827, 256, 256, 16
        $region32: #{tpu_custom_call.1} parent=27 // pred_fallthru
          _
      $region28: #{tpu_custom_call.1} parent=5 // pred_fallthru
        _
      %p850 = scmp.le.s32.totalorder 2, %s11
      // Predicated region
      $region33: #{tpu_custom_call.1} parent=5 // pred_check
        %p851 = pneg %p850
      $region34: #{tpu_custom_call.1} parent=5 // pred_check_branch
        %853 = sbr.rel (%p851) target = $region36
      $region35: #{tpu_custom_call.1} parent=5 // pred_region
        %s854 = ssub.s32 %s11, 2
        // Predicated region
        $region37: #{tpu_custom_call.1} parent=35 // pred_check
          %p855 = pneg %p106
        $region38: #{tpu_custom_call.1} parent=35 // pred_check_branch
          %857 = sbr.rel (%p855) target = $region40
        $region39: #{tpu_custom_call.1} parent=35 // pred_region
          %s858 = sand.u32 %s91, 1
          %s859 = scalar_lea.sflag [#allocation4], %s858
          %s860 = sand.u32 %s91, 1
          %s861 = smul.addr %s860, 32
          %s862 = scalar_lea.vmem [#allocation3], %s861
          %864 = dma.done %s859, 512
        $region40: #{tpu_custom_call.1} parent=35 // pred_fallthru
          _
      $region36: #{tpu_custom_call.1} parent=5 // pred_fallthru
        _
    $region6: #{tpu_custom_call.1} parent=1 // loop_footer
      %s15 = sadd.s32 1, %s11
    $region7: #{tpu_custom_call.1} parent=1 // loop_footer_branch
      %10 = sbr.rel target = $region3
    $region8: #{tpu_custom_call.1} parent=1 // loop_exit
      _
    %865 = vsyncpa [#allocation4], 1
    %s866 = scalar_lea.sflag [#allocation4], 1
    %867 = vsyncpa %s866, 1

</llo_original>
